<compile_context>
chip_gen: v6e
topology: v6e:2x2x1
jax: 0.10.0
libtpu: 0.0.40
codegen_flags: <defaults>
</compile_context>

<pallas_src>
import math

import jax
import jax.numpy as jnp
from jax.experimental import pallas as pl
from jax.experimental.pallas import tpu as pltpu


_TARGET_BLOCK_BYTES = 4 * 1024 * 1024   # ~4 MiB x-block (roofline knee; sized for v7x's faster HBM)
_MIN_BLOCK_BYTES = 512 * 1024           # don't shred mid-size inputs into overhead-dominated steps
_VMEM_LIMIT_BYTES = 32 * 1024 * 1024    # lifts v5e's 16 MiB default scoped VMEM; safe on v6e/v7x


def _round_up(a: int, b: int) -> int:
    return -(-a // b) * b


def _sublane_min(dtype) -> int:
    # Native sublane packing: 8 rows for 4-byte, 16 for 2-byte, 32 for 1-byte dtypes.
    itemsize = jnp.dtype(dtype).itemsize
    return {4: 8, 2: 16, 1: 32}.get(itemsize, 8)


def _pick_target_bytes(total_bytes: int) -> int:
    # Cap the block so large tensors get >= ~8 grid steps (2 TCs on v7x + pipeline overlap),
    # but never go below a floor that keeps per-step overhead negligible.
    return min(_TARGET_BLOCK_BYTES, max(total_bytes // 8, _MIN_BLOCK_BYTES))


# ---------------------------------------------------------------------------
# Kernel (shared by both layouts): broadcasted elementwise multiply.
# ---------------------------------------------------------------------------
def _layer_scale_kernel(scale_ref, x_ref, o_ref):
    # channel_last : scale (1, lane)    * x (tile_rows, lane)
    # channel_first: scale (1, tc, 1)   * x (bb, tc, tt)
    o_ref[...] = scale_ref[...] * x_ref[...]


# ---------------------------------------------------------------------------
# channel_last path: x is [*, C]
# ---------------------------------------------------------------------------
def _layer_scale_channel_last(x: jax.Array, scale: jax.Array) -> jax.Array:
    orig_shape = x.shape
    C = orig_shape[-1]
    rows = math.prod(orig_shape[:-1]) if len(orig_shape) > 1 else 1
    x2 = x.reshape(rows, C)

    itemsize = jnp.dtype(x.dtype).itemsize
    sub_min = _sublane_min(x.dtype)

    # Fold k rows into the lane axis so the lane width is a multiple of 128 (lane-dense stores).
    k = 1 if C % 128 == 0 else 128 // math.gcd(C, 128)
    lane = k * C

    # Pad ONLY up to a multiple of k (required by the fold). Ragged row-tiles are left to Pallas.
    rows_k = _round_up(rows, k)
    padded = rows_k != rows
    if padded:
        x2 = jnp.pad(x2, ((0, rows_k - rows), (0, 0)))
    rows2 = rows_k // k
    x3 = x2.reshape(rows2, lane)

    scale_row = (jnp.tile(scale, (k,)) if k > 1 else scale).reshape(1, lane)

    row_bytes = lane * itemsize
    target_bytes = _pick_target_bytes(rows2 * row_bytes)
    tile_rows = max(sub_min, (target_bytes // row_bytes) // sub_min * sub_min)
    tile_rows = min(tile_rows, _round_up(rows2, sub_min))

    grid = (pl.cdiv(rows2, tile_rows),)
    out = pl.pallas_call(
        _layer_scale_kernel,
        # Exact (unpadded-to-tile) shape: the ragged last block gets masked writes.
        out_shape=jax.ShapeDtypeStruct((rows2, lane), x.dtype),
        grid=grid,
        in_specs=[
            pl.BlockSpec((1, lane), lambda i: (0, 0)),            # scale row (resident)
            pl.BlockSpec((tile_rows, lane), lambda i: (i, 0)),    # x tile
        ],
        out_specs=pl.BlockSpec((tile_rows, lane), lambda i: (i, 0)),
        compiler_params=pltpu.CompilerParams(
            dimension_semantics=("parallel",),
            vmem_limit_bytes=_VMEM_LIMIT_BYTES,
        ),
    )(scale_row, x3)

    out = out.reshape(rows_k, C)
    if padded:
        out = out[:rows]
    return out.reshape(orig_shape)


# ---------------------------------------------------------------------------
# channel_first path: x is [*, C, T]
# ---------------------------------------------------------------------------
def _layer_scale_channel_first(x: jax.Array, scale: jax.Array) -> jax.Array:
    assert x.ndim >= 2, "channel_last=False expects [*, C, T]"
    orig_shape = x.shape
    C, T = orig_shape[-2], orig_shape[-1]
    B = math.prod(orig_shape[:-2]) if x.ndim > 2 else 1
    x3 = x.reshape(B, C, T)

    itemsize = jnp.dtype(x.dtype).itemsize
    sub_min = _sublane_min(x.dtype)

    # Only for very short time axes pad T up to one full lane (128) so stores stay lane-dense.
    # For T >= 128 we never pad: ragged edge blocks are handled by masked writes.
    T_work = T
    padded_T = False
    if T < 128:
        T_work = 128
        x3 = jnp.pad(x3, ((0, 0), (0, 0), (0, 128 - T)))
        padded_T = True

    total_bytes = B * C * T_work * itemsize
    target_bytes = _pick_target_bytes(total_bytes)

    # Channel (sublane) tile: multiple of the dtype's native sublane packing, modest cap.
    tc = min(_round_up(C, sub_min), 32 * sub_min)
    # Time (lane) tile: large multiple of 128, bounded by the per-block budget.
    tt = max(128, (target_bytes // (tc * itemsize)) // 128 * 128)
    tt = min(tt, _round_up(T_work, 128))

    # If a single (tc, tt) slab is far below the target, block several batch elements per step.
    blk_bytes = tc * tt * itemsize
    bb = 1
    if blk_bytes < target_bytes:
        bb = int(min(B, max(1, target_bytes // blk_bytes)))

    scale_col = scale.reshape(1, C, 1)

    grid = (pl.cdiv(B, bb), pl.cdiv(C, tc), pl.cdiv(T_work, tt))
    out = pl.pallas_call(
        _layer_scale_kernel,
        out_shape=jax.ShapeDtypeStruct((B, C, T_work), x.dtype),
        grid=grid,
        in_specs=[
            pl.BlockSpec((1, tc, 1), lambda bi, ci, ti: (0, ci, 0)),     # scale column (resident per ci)
            pl.BlockSpec((bb, tc, tt), lambda bi, ci, ti: (bi, ci, ti)), # x tile
        ],
        out_specs=pl.BlockSpec((bb, tc, tt), lambda bi, ci, ti: (bi, ci, ti)),
        compiler_params=pltpu.CompilerParams(
            dimension_semantics=("parallel", "parallel", "parallel"),
            vmem_limit_bytes=_VMEM_LIMIT_BYTES,
        ),
    )(scale_col, x3)

    if padded_T:
        out = out[:, :, :T]
    return out.reshape(orig_shape)


# ---------------------------------------------------------------------------
# Public wrapper
# ---------------------------------------------------------------------------
def layer_scale(x: jax.Array, scale: jax.Array, channel_last: bool = True) -> jax.Array:
    """Apply LayerScale. `scale` has shape (C,)."""
    if x.size == 0:
        return x
    # Keep bf16 inputs on the packed bf16 VPU path (one extra rounding of gamma vs fp32 promote).
    scale = scale.astype(x.dtype)
    if channel_last:
        assert scale.shape == (x.shape[-1],)
        return _layer_scale_channel_last(x, scale)
    else:
        assert scale.shape == (x.shape[-2],)
        return _layer_scale_channel_first(x, scale)


# ---------------------------------------------------------------------------
# Deterministic parameter init (matches nn.Parameter(torch.full((channels,), init)))
# ---------------------------------------------------------------------------
def init_layer_scale_params(channels: int, init: float = 1e-4, dtype=jnp.float32):
    return jnp.full((channels,), init, dtype=dtype)


if __name__ == "__main__":
    key = jax.random.PRNGKey(0)
    k1, k2, k3, k4 = jax.random.split(key, 4)

    init = 1e-4

    # --- channel_last=True: x shape [B, T, C], f32, small C (lane folding, ragged row block) ---
    B, T, C = 2, 8, 32
    scale = init_layer_scale_params(C, init)
    x_last = jax.random.normal(k1, (B, T, C), dtype=jnp.float32)
    out_last = jax.block_until_ready(layer_scale(x_last, scale, channel_last=True))
    ref_last = scale * x_last
    assert out_last.shape == x_last.shape and out_last.dtype == x_last.dtype
    assert jnp.allclose(out_last, ref_last, atol=1e-6, rtol=1e-6)

    # --- channel_last=False: x shape [B, C, T], f32, T < 128 (lane pad path + batch blocking) ---
    B2, C2, T2 = 2, 32, 64
    scale2 = init_layer_scale_params(C2, init)
    x_first = jax.random.normal(k2, (B2, C2, T2), dtype=jnp.float32)
    out_first = jax.block_until_ready(layer_scale(x_first, scale2, channel_last=False))
    ref_first = scale2[:, None] * x_first
    assert out_first.shape == x_first.shape and out_first.dtype == x_first.dtype
    assert jnp.allclose(out_first, ref_first, atol=1e-6, rtol=1e-6)

    # --- channel_last=True, bf16, ragged rows & non-power-of-two C (fold pad + dtype path) ---
    B3, T3, C3 = 2, 7, 48
    scale3 = init_layer_scale_params(C3, init, dtype=jnp.bfloat16)
    x_bf16 = jax.random.normal(k3, (B3, T3, C3), dtype=jnp.bfloat16)
    out_bf16 = jax.block_until_ready(layer_scale(x_bf16, scale3, channel_last=True))
    ref_bf16 = scale3 * x_bf16
    assert out_bf16.shape == x_bf16.shape and out_bf16.dtype == jnp.bfloat16
    assert jnp.allclose(out_bf16.astype(jnp.float32), ref_bf16.astype(jnp.float32),
                        atol=1e-2, rtol=1e-2)

    # --- channel_last=False, T >= 128, ragged C/T/B (no-pad path with masked edge blocks) ---
    B4, C4, T4 = 3, 20, 200
    scale4 = init_layer_scale_params(C4, init)
    x4 = jax.random.normal(k4, (B4, C4, T4), dtype=jnp.float32)
    out4 = jax.block_until_ready(layer_scale(x4, scale4, channel_last=False))
    ref4 = scale4[:, None] * x4
    assert out4.shape == x4.shape and out4.dtype == x4.dtype
    assert jnp.allclose(out4, ref4, atol=1e-6, rtol=1e-6)

    print("KERNEL_OK")
</pallas_src>

<mosaic_0001>
module attributes {stable_mosaic.version = 11 : i64} {
  func.func @_layer_scale_kernel(%arg0: i32, %arg1: memref<1x128xf32, #tpu.memory_space<vmem>>, %arg2: memref<8x128xf32, #tpu.memory_space<vmem>>, %arg3: memref<8x128xf32, #tpu.memory_space<vmem>>) attributes {dimension_semantics = [#tpu.dimension_semantics<parallel>], iteration_bounds = array<i64: 1>, scalar_prefetch = 0 : i64, scratch_operands = 0 : i64, tpu.core_type = #tpu.core_type<tc>, window_params = [{pipeline_mode = #tpu.pipeline_mode<synchronous>, transform_indices = @transform_0, window_bounds = array<i64: 1, 128>}, {transform_indices = @transform_1, window_bounds = array<i64: 8, 128>}, {transform_indices = @transform_2, window_bounds = array<i64: 8, 128>}]} {
    %c0 = arith.constant 0 : index
    %c0_0 = arith.constant 0 : index
    %0 = vector.load %arg1[%c0, %c0_0] : memref<1x128xf32, #tpu.memory_space<vmem>>, vector<1x128xf32>
    %c0_1 = arith.constant 0 : index
    %c0_2 = arith.constant 0 : index
    %1 = vector.load %arg2[%c0_1, %c0_2] : memref<8x128xf32, #tpu.memory_space<vmem>>, vector<8x128xf32>
    %2 = vector.broadcast %0 : vector<1x128xf32> to vector<8x128xf32>
    %3 = arith.mulf %2, %1 : vector<8x128xf32>
    %c0_3 = arith.constant 0 : index
    %c0_4 = arith.constant 0 : index
    %4 = vector.load %arg3[%c0_3, %c0_4] : memref<8x128xf32, #tpu.memory_space<vmem>>, vector<8x128xf32>
    tpu.vector_store %arg3[%c0_3, %c0_4], %3 {strides = array<i32>} : memref<8x128xf32, #tpu.memory_space<vmem>>, vector<8x128xf32>,
    return
  }
  func.func @transform_0(%arg0: i32) -> (i32, i32) {
    %c0_i32 = arith.constant 0 : i32
    %c0_i32_0 = arith.constant 0 : i32
    %c0_i32_1 = arith.constant 0 : i32
    return %c0_i32, %c0_i32_0 : i32, i32
  }
  func.func @transform_1(%arg0: i32) -> (i32, i32) {
    %c0_i32 = arith.constant 0 : i32
    %c0_i32_0 = arith.constant 0 : i32
    return %arg0, %c0_i32 : i32, i32
  }
  func.func @transform_2(%arg0: i32) -> (i32, i32) {
    %c0_i32 = arith.constant 0 : i32
    %c0_i32_0 = arith.constant 0 : i32
    return %arg0, %c0_i32 : i32, i32
  }
}

</mosaic_0001>

<llo_original>
// kernel: tpu_custom_call.1
$region0: #{tpu_custom_call.1}
  #allocation0 [shape = 'u32[]', space=smem, size = 0x4, offset = 0x4, fixed_abs, tag = 'smem constant byte address 0x4 - core index']
  #allocation1 [shape = 'u32[144,128]{1,0:T(1,128)}', space=vmem, size = 0x12000, scoped, tag = 'internal scratch']
  %s0 = inlined_call_operand.hbm [shape: f32[1,128], index: 0, kind: input, shape index: {}]
  %s1 = inlined_call_operand.hbm [shape: f32[4,128], index: 1, kind: input, shape index: {}]
  %s2 = inlined_call_operand.hbm [shape: f32[4,128], index: 2, kind: output, shape index: {}]
  %s3 = sld [smem:[#allocation0]]
  $region26: #{tpu_custom_call.1} parent=0
    _
  %s5 = ssub.s32 1, %s3
  %s6 = scalar_select 0, %s5, %s3
  $region1: #{tpu_custom_call.1} parent=0
    #allocation2 [shape = 'u8[512]{0}', space=vmem, size = 0x400, scoped, tag = 'input window, operand 0, single buffered']
    #allocation3 [shape = 's32[1]{0}', space=sflag, size = 0x4, scoped, tag = 'scoped memory for tpu_custom_call.1']
    #allocation4 [shape = 's32[1]{0}', space=sflag, size = 0x4, scoped, tag = 'scoped memory for tpu_custom_call.1']
    #allocation5 [shape = 'u8[4096]{0}', space=vmem, size = 0x1000, scoped, tag = 'input window, operand 1, single buffered']
    #allocation6 [shape = 's32[1]{0}', space=sflag, size = 0x4, scoped, tag = 'scoped memory for tpu_custom_call.1']
    #allocation7 [shape = 'u8[4096]{0}', space=vmem, size = 0x1000, scoped, tag = 'output window, operand 0, single buffered']
    %7 = vsyncpa [#allocation3], 0
    %8 = vsyncpa [#allocation6], 0
    %9 = vsyncpa [#allocation4], 0
    // Predicated region
    $region2: #{tpu_custom_call.1} parent=1 // pred_check
      _
    $region3: #{tpu_custom_call.1} parent=1 // pred_check_branch
      %11 = sbr.rel (0) target = $region5
    $region4: #{tpu_custom_call.1} parent=1 // pred_region
      %s13 = ssub.s32 16, 16
      %14 = vsyncadd [#allocation3], %s13
      %s16 = sshll.u32 [#allocation2], 4
      %s17 = int_to_ptr.vmem [resolvable:$true] %s16
      %19 = dma.hbm_to_vmem [thread:$0]  %s0, 16, %s17, [#allocation3]
    $region5: #{tpu_custom_call.1} parent=1 // pred_fallthru
      _
    // Predicated region
    $region6: #{tpu_custom_call.1} parent=1 // pred_check
      _
    $region7: #{tpu_custom_call.1} parent=1 // pred_check_branch
      %21 = sbr.rel (0) target = $region9
    $region8: #{tpu_custom_call.1} parent=1 // pred_region
      %s23 = ssub.s32 128, 64
      %24 = vsyncadd [#allocation6], %s23
      %s25 = sshll.u32 [#allocation5], 4
      %s26 = int_to_ptr.vmem [resolvable:$true] %s25
      %31 = dma.hbm_to_vmem [thread:$0]  %s1, 64, %s26, [#allocation6], 64, 64, 4
    $region9: #{tpu_custom_call.1} parent=1 // pred_fallthru
      _
    // Predicated region
    $region10: #{tpu_custom_call.1} parent=1 // pred_check
      _
    $region11: #{tpu_custom_call.1} parent=1 // pred_check_branch
      %33 = sbr.rel (0) target = $region13
    $region12: #{tpu_custom_call.1} parent=1 // pred_region
      %34 = dma.done [#allocation3], 16
    $region13: #{tpu_custom_call.1} parent=1 // pred_fallthru
      _
    // Predicated region
    $region14: #{tpu_custom_call.1} parent=1 // pred_check
      _
    $region15: #{tpu_custom_call.1} parent=1 // pred_check_branch
      %36 = sbr.rel (0) target = $region17
    $region16: #{tpu_custom_call.1} parent=1 // pred_region
      %37 = dma.done [#allocation6], 128
    $region17: #{tpu_custom_call.1} parent=1 // pred_fallthru
      _
    %v38 = vld [vmem:[#allocation2] sm:$0x1]
    %v39 = vld [vmem:[#allocation5] sm:$0xff]
    %v41 = vlaneseq
    %v42 = vshrl.u32 %v41, 7
    %v43 = vsub.s32 0, %v42
    %v44 = vrot.slane %v38, %v43
    %v46 = vmul.f32 %v44, %v39
    %47 = vst [vmem:[#allocation7] sm:$0xff] %v46
    // Predicated region
    $region18: #{tpu_custom_call.1} parent=1 // pred_check
      _
    $region19: #{tpu_custom_call.1} parent=1 // pred_check_branch
      %49 = sbr.rel (0) target = $region21
    $region20: #{tpu_custom_call.1} parent=1 // pred_region
      %s51 = ssub.s32 128, 64
      %52 = vsyncadd [#allocation4], %s51
      %s53 = sshll.u32 [#allocation7], 4
      %s54 = int_to_ptr.vmem [resolvable:$true] %s53
      %59 = dma.vmem_to_hbm [thread:$0]  %s54, 64, %s2, [#allocation4], 64, 64, 4
    $region21: #{tpu_custom_call.1} parent=1 // pred_fallthru
      _
    // Predicated region
    $region22: #{tpu_custom_call.1} parent=1 // pred_check
      _
    $region23: #{tpu_custom_call.1} parent=1 // pred_check_branch
      %61 = sbr.rel (0) target = $region25
    $region24: #{tpu_custom_call.1} parent=1 // pred_region
      %62 = dma.done [#allocation4], 128
    $region25: #{tpu_custom_call.1} parent=1 // pred_fallthru
      _
    %63 = vsyncpa [#allocation3], 1
    %64 = vsyncpa [#allocation6], 1
    %65 = vsyncpa [#allocation4], 1

</llo_original>
